<compile_context>
chip_gen: v7x
topology: tpu7x:2x2x1
jax: 0.10.0
libtpu: 0.0.40
codegen_flags: <defaults>
</compile_context>

<pallas_src>
import re

import jax
import jax.numpy as jnp
from jax.experimental import pallas as pl
from jax.experimental.pallas import tpu as pltpu

_LANE = 128
_FAST_PATH_BYTES = 512 * 1024   # below this, fused XLA elementwise wins


def _h_swish_kernel(x_ref, o_ref):
    x = x_ref[...]
    # relu6(x + 3) / 6 * x -- pure VPU work on one lane-dense tile.
    inner = jnp.clip(x + 3.0, 0.0, 6.0) * (1.0 / 6.0)
    o_ref[...] = (inner * x).astype(o_ref.dtype)


def _sublane_multiple(dtype) -> int:
    itemsize = jnp.dtype(dtype).itemsize
    if itemsize >= 4:
        return 8
    return 8 * (4 // itemsize)  # bf16 -> 16, int8/fp8 -> 32


def _round_up(a: int, b: int) -> int:
    return ((a + b - 1) // b) * b


def _chip_generation() -> int:
    """Best-effort TPU generation (5, 6, 7, ...); 0 if undetectable."""
    try:
        kind = jax.devices()[0].device_kind.lower()
        m = re.search(r"v(\d+)", kind) or re.search(r"(\d+)", kind)
        return int(m.group(1)) if m else 0
    except Exception:
        return 0


def _tiling_policy():
    """Returns (target_tile_bytes, vmem_limit_bytes_or_None, two_tensorcores)."""
    gen = _chip_generation()
    if gen >= 7:
        # 8 MiB tile x 2 arrays x 2 pipeline buffers = 32 MiB; raise the
        # scoped-VMEM limit (64 MiB physical per TC) to keep headroom.
        return 8 << 20, 48 << 20, True
    if gen == 6:
        # 4 MiB x 4 buffers = 16 MiB, comfortably under the 32 MiB default.
        return 4 << 20, None, False
    # v5e (16 MiB default scoped VMEM) or unknown: stay conservative.
    return 2 << 20, None, False


def _choose_cols(n: int):
    """Widest lane-dense width that divides n (copy-free path), else None."""
    for c in (2048, 1024, 512, 256, 128):
        if n % c == 0:
            return c
    return None


def h_swish(x: jax.Array, *, force_pallas: bool = False) -> jax.Array:
    """Elementwise h_swish via a Pallas TPU kernel (layout-agnostic)."""
    orig_shape = x.shape
    dtype = x.dtype
    n = x.size
    itemsize = jnp.dtype(dtype).itemsize

    def _xla_fallback(v):
        return (jnp.clip(v + 3.0, 0.0, 6.0) * (1.0 / 6.0)) * v

    if n == 0:
        return x

    # Fast path: launch overhead dwarfs the HBM traffic for small tensors.
    if not force_pallas and n * itemsize <= _FAST_PATH_BYTES:
        return _xla_fallback(x)

    cols = _choose_cols(n)
    pad = 0
    if cols is None:
        # Size not a multiple of 128: kernel + pad + slice would add extra
        # full HBM passes, so the fused XLA op is strictly better ...
        if not force_pallas:
            return _xla_fallback(x)
        # ... unless the Pallas path is explicitly requested (tests).
        cols = _LANE
        pad = _round_up(n, cols) - n

    flat = x.reshape(-1)
    if pad:
        flat = jnp.pad(flat, (0, pad))      # h_swish(0) == 0; sliced off below
    rows = (n + pad) // cols
    x2d = flat.reshape(rows, cols)

    sub = _sublane_multiple(dtype)
    tile_bytes, vmem_limit, two_cores = _tiling_policy()

    target_rows = max(sub, (tile_bytes // (cols * itemsize)) // sub * sub)
    tile_rows = min(target_rows, _round_up(rows, sub))
    if two_cores and rows > 4 * sub:
        # v7x has 2 TensorCores: aim for >= 4 row-blocks (>= 2 per core) so
        # each core keeps input-prefetch / output-writeback overlap.
        tile_rows = min(tile_rows, max(sub, (rows // 4) // sub * sub))
    if tile_rows >= rows:
        tile_rows = rows                    # single full-array block (always legal)

    grid = (pl.cdiv(rows, tile_rows),)      # ragged last block handled by Pallas

    cp_kwargs = dict(dimension_semantics=("parallel",))
    if vmem_limit is not None:
        cp_kwargs["vmem_limit_bytes"] = vmem_limit

    out2d = pl.pallas_call(
        _h_swish_kernel,
        out_shape=jax.ShapeDtypeStruct((rows, cols), dtype),
        grid_spec=pltpu.PrefetchScalarGridSpec(
            num_scalar_prefetch=0,
            grid=grid,
            in_specs=[pl.BlockSpec((tile_rows, cols), lambda i: (i, 0))],
            out_specs=pl.BlockSpec((tile_rows, cols), lambda i: (i, 0)),
        ),
        compiler_params=pltpu.CompilerParams(**cp_kwargs),
    )(x2d)

    out = out2d.reshape(-1)
    if pad:
        out = out[:n]
    return out.reshape(orig_shape)


def h_swish_ref(x: jax.Array) -> jax.Array:
    # Pure-JAX reference mirroring the PyTorch forward exactly.
    return jnp.clip(x + 3.0, 0.0, 6.0) / 6.0 * x


if __name__ == "__main__":
    key = jax.random.PRNGKey(0)
    k1, k2, k3 = jax.random.split(key, 3)

    # 1) Small NCHW input consistent with FBNet blocks; force the Pallas path
    #    so the kernel itself is exercised (default path would use the tiny-
    #    tensor fast path).
    x_small = jax.random.normal(k1, (2, 4, 16, 16), dtype=jnp.float32) * 4.0
    out_small = jax.block_until_ready(h_swish(x_small, force_pallas=True))
    ref_small = h_swish_ref(x_small)
    assert out_small.shape == x_small.shape and out_small.dtype == x_small.dtype
    assert jnp.allclose(out_small, ref_small, atol=1e-6, rtol=1e-6)
    # Default (fast-path) call must agree too.
    assert jnp.allclose(jax.block_until_ready(h_swish(x_small)), ref_small,
                        atol=1e-6, rtol=1e-6)

    # 2) Moderately sized input (1 MiB) exercising the copy-free lane-dense
    #    path (cols=2048 divides n exactly -> no pad, no slice).
    x_med = jax.random.normal(k2, (8, 32, 32, 32), dtype=jnp.float32) * 4.0
    out_med = jax.block_until_ready(h_swish(x_med))
    assert jnp.allclose(out_med, h_swish_ref(x_med), atol=1e-6, rtol=1e-6)

    # 3) Awkward (non-128-divisible) shape: forced Pallas exercises the
    #    minimal-pad path; the default call uses the XLA fallback.
    x_odd = jax.random.normal(k3, (3, 5, 7, 11), dtype=jnp.float32) * 4.0
    out_odd = jax.block_until_ready(h_swish(x_odd, force_pallas=True))
    assert jnp.allclose(out_odd, h_swish_ref(x_odd), atol=1e-6, rtol=1e-6)
    assert jnp.allclose(jax.block_until_ready(h_swish(x_odd)),
                        h_swish_ref(x_odd), atol=1e-6, rtol=1e-6)

    # 4) bf16 input exercising the 16-sublane quantum and a multi-block grid.
    x_bf16 = (jax.random.normal(k2, (4, 64, 32, 32), dtype=jnp.float32) * 4.0
              ).astype(jnp.bfloat16)
    out_bf16 = jax.block_until_ready(h_swish(x_bf16, force_pallas=True))
    assert out_bf16.dtype == jnp.bfloat16
    assert jnp.allclose(out_bf16.astype(jnp.float32),
                        h_swish_ref(x_bf16).astype(jnp.float32),
                        atol=3e-2, rtol=3e-2)

    print("KERNEL_OK")
</pallas_src>

<mosaic_0001>
module attributes {stable_mosaic.version = 11 : i64} {
  func.func @_h_swish_kernel(%arg0: i32, %arg1: memref<1x2048xf32, #tpu.memory_space<vmem>>, %arg2: memref<1x2048xf32, #tpu.memory_space<vmem>>) attributes {dimension_semantics = [#tpu.dimension_semantics<parallel>], iteration_bounds = array<i64: 1>, scalar_prefetch = 0 : i64, scratch_operands = 0 : i64, tpu.core_type = #tpu.core_type<tc>, window_params = [{transform_indices = @transform_0, window_bounds = array<i64: 1, 2048>}, {transform_indices = @transform_1, window_bounds = array<i64: 1, 2048>}]} {
    %c0 = arith.constant 0 : index
    %c0_0 = arith.constant 0 : index
    %0 = vector.load %arg1[%c0, %c0_0] : memref<1x2048xf32, #tpu.memory_space<vmem>>, vector<1x2048xf32>
    %cst = arith.constant 3.000000e+00 : f32
    %1 = vector.broadcast %cst : f32 to vector<1x2048xf32>
    %2 = arith.addf %0, %1 : vector<1x2048xf32>
    %cst_1 = arith.constant 0.000000e+00 : f32
    %cst_2 = arith.constant 6.000000e+00 : f32
    %3 = vector.broadcast %cst_1 : f32 to vector<1x2048xf32>
    %4 = arith.maximumf %3, %2 : vector<1x2048xf32>
    %5 = vector.broadcast %cst_2 : f32 to vector<1x2048xf32>
    %6 = arith.minimumf %5, %4 : vector<1x2048xf32>
    %cst_3 = arith.constant 0.166666672 : f32
    %7 = vector.broadcast %cst_3 : f32 to vector<1x2048xf32>
    %8 = arith.mulf %6, %7 : vector<1x2048xf32>
    %9 = arith.mulf %8, %0 : vector<1x2048xf32>
    %c0_4 = arith.constant 0 : index
    %c0_5 = arith.constant 0 : index
    %10 = vector.load %arg2[%c0_4, %c0_5] : memref<1x2048xf32, #tpu.memory_space<vmem>>, vector<1x2048xf32>
    tpu.vector_store %arg2[%c0_4, %c0_5], %9 {strides = array<i32>} : memref<1x2048xf32, #tpu.memory_space<vmem>>, vector<1x2048xf32>,
    return
  }
  func.func @transform_0(%arg0: i32) -> (i32, i32) {
    %c0_i32 = arith.constant 0 : i32
    %c0_i32_0 = arith.constant 0 : i32
    return %arg0, %c0_i32 : i32, i32
  }
  func.func @transform_1(%arg0: i32) -> (i32, i32) {
    %c0_i32 = arith.constant 0 : i32
    %c0_i32_0 = arith.constant 0 : i32
    return %arg0, %c0_i32 : i32, i32
  }
}

</mosaic_0001>

<llo_original>
// kernel: tpu_custom_call.1
$region0: #{tpu_custom_call.1}
  #allocation0 [shape = 'u32[]', space=smem, size = 0x4, offset = 0x4, fixed_abs, tag = 'smem constant byte address 0x4 - core index']
  #allocation1 [shape = 'u32[144,128]{1,0:T(1,128)}', space=vmem, size = 0x12000, scoped, tag = 'internal scratch']
  %s0 = inlined_call_operand.hbm [shape: f32[1,2048], index: 0, kind: input, shape index: {}]
  %s1 = inlined_call_operand.hbm [shape: f32[1,2048], index: 1, kind: output, shape index: {}]
  %s2 = sld [smem:[#allocation0]]
  $region18: #{tpu_custom_call.1} parent=0
    _
  %s4 = ssub.s32 1, %s2
  %s5 = scalar_select 0, %s4, %s2
  $region1: #{tpu_custom_call.1} parent=0
    #allocation2 [shape = 'u8[8192]{0}', space=vmem, size = 0x2000, scoped, tag = 'input window, operand 0, single buffered']
    #allocation3 [shape = 's32[1]{0}', space=sflag, size = 0x4, scoped, tag = 'scoped memory for tpu_custom_call.1']
    #allocation4 [shape = 's32[1]{0}', space=sflag, size = 0x4, scoped, tag = 'scoped memory for tpu_custom_call.1']
    #allocation5 [shape = 'u8[8192]{0}', space=vmem, size = 0x2000, scoped, tag = 'output window, operand 0, single buffered']
    %6 = vsyncpa [#allocation3], 0
    %7 = vsyncpa [#allocation4], 0
    // Predicated region
    $region2: #{tpu_custom_call.1} parent=1 // pred_check
      _
    $region3: #{tpu_custom_call.1} parent=1 // pred_check_branch
      %9 = sbr.rel (0) target = $region5
    $region4: #{tpu_custom_call.1} parent=1 // pred_region
      %s11 = ssub.s32 256, 256
      %12 = vsyncadd [#allocation3], %s11
      %s14 = sshll.u32 [#allocation2], 4
      %s15 = int_to_ptr.vmem [resolvable:$true] %s14
      %17 = dma.hbm_to_vmem [thread:$0]  %s0, 256, %s15, [#allocation3]
    $region5: #{tpu_custom_call.1} parent=1 // pred_fallthru
      _
    // Predicated region
    $region6: #{tpu_custom_call.1} parent=1 // pred_check
      _
    $region7: #{tpu_custom_call.1} parent=1 // pred_check_branch
      %19 = sbr.rel (0) target = $region9
    $region8: #{tpu_custom_call.1} parent=1 // pred_region
      %20 = dma.done [#allocation3], 256
    $region9: #{tpu_custom_call.1} parent=1 // pred_fallthru
      _
    %v21 = vld [vmem:[#allocation2] sm:$0xff]
    %v22 = vld [vmem:[#allocation2 + $0x8] sm:$0xff]
    %v23 = vadd.f32 %v21, 3.0
    %v24 = vadd.f32 %v22, 3.0
    %v25 = vmax.f32 %v23, 0.0
    %v26 = vmax.f32 %v24, 0.0
    %v27 = vmin.f32 %v25, 6.0
    %v28 = vmin.f32 %v26, 6.0
    %v29 = vmul.f32 %v27, 0.16666667
    %v30 = vmul.f32 %v28, 0.16666667
    %v31 = vmul.f32 %v29, %v21
    %v32 = vmul.f32 %v30, %v22
    %33 = vst [vmem:[#allocation5] sm:$0xff] %v31
    %34 = vst [vmem:[#allocation5 + $0x8] sm:$0xff] %v32
    // Predicated region
    $region10: #{tpu_custom_call.1} parent=1 // pred_check
      _
    $region11: #{tpu_custom_call.1} parent=1 // pred_check_branch
      %36 = sbr.rel (0) target = $region13
    $region12: #{tpu_custom_call.1} parent=1 // pred_region
      %s38 = ssub.s32 256, 256
      %39 = vsyncadd [#allocation4], %s38
      %s41 = sshll.u32 [#allocation5], 4
      %s42 = int_to_ptr.vmem [resolvable:$true] %s41
      %44 = dma.vmem_to_hbm [thread:$0]  %s42, 256, %s1, [#allocation4]
    $region13: #{tpu_custom_call.1} parent=1 // pred_fallthru
      _
    // Predicated region
    $region14: #{tpu_custom_call.1} parent=1 // pred_check
      _
    $region15: #{tpu_custom_call.1} parent=1 // pred_check_branch
      %46 = sbr.rel (0) target = $region17
    $region16: #{tpu_custom_call.1} parent=1 // pred_region
      %47 = dma.done [#allocation4], 256
    $region17: #{tpu_custom_call.1} parent=1 // pred_fallthru
      _
    %48 = vsyncpa [#allocation3], 1
    %49 = vsyncpa [#allocation4], 1

</llo_original>
